<compile_context>
chip_gen: v7x
topology: tpu7x:2x2x1
jax: 0.10.0
libtpu: 0.0.40
codegen_flags: <defaults>
</compile_context>

<pallas_src>
import jax
import jax.numpy as jnp
from jax.experimental import pallas as pl
from jax.experimental.pallas import tpu as pltpu

# Candidate lane widths, largest first: wide lane-dense output blocks give
# full (unmasked) vst stores and amortize the ~0.35 us per-grid-step overhead.
_LANE_WIDTHS = (32768, 16384, 8192, 4096, 2048, 1024, 512, 256, 128)

# Target bytes per block buffer.  Double-buffered input + output ~= 4 copies:
# 4 * 3 MiB = 12 MiB < 16 MiB (v5e scoped default) < 32 MiB (v6e/v7x default).
_TARGET_BLOCK_BYTES = 3 * 1024 * 1024


def _identity_kernel(x_ref, o_ref):
    # Hot path: straight VMEM tile copy (elementwise identity).
    o_ref[...] = x_ref[...]


def _sublane_multiple(dtype) -> int:
    # Sub-32-bit dtypes pack along sublanes: f32 -> 8, bf16 -> 16, i8/fp8 -> 32.
    itemsize = jnp.dtype(dtype).itemsize
    return max(8, 32 // max(1, itemsize))


@jax.jit
def identity(x: jax.Array) -> jax.Array:
    """Pallas TPU implementation of Identity.forward(x) -> x."""
    orig_shape = x.shape
    total = x.size
    if total == 0:
        # Nothing to copy; strict identity.
        return x

    itemsize = jnp.dtype(x.dtype).itemsize

    # Fast path: view the array as a lane-dense 2D slab with NO padding.
    cols = next((c for c in _LANE_WIDTHS if total % c == 0), None)

    if cols is not None:
        rows = total // cols
        sub = _sublane_multiple(x.dtype)
        max_rows = max(1, _TARGET_BLOCK_BYTES // (cols * itemsize))
        if max_rows >= rows:
            # Full extent along rows: bypasses the (8,128) divisibility rule.
            tile_rows = rows
        else:
            tile_rows = max(sub, (max_rows // sub) * sub)
        grid = (pl.cdiv(rows, tile_rows),)  # ragged last block handled by Pallas

        x2d = x.reshape(rows, cols)  # bitcast under jit (contiguous row-major)
        y2d = pl.pallas_call(
            _identity_kernel,
            out_shape=jax.ShapeDtypeStruct((rows, cols), x.dtype),
            grid_spec=pltpu.PrefetchScalarGridSpec(
                num_scalar_prefetch=0,
                grid=grid,
                in_specs=[pl.BlockSpec((tile_rows, cols), lambda i: (i, 0))],
                out_specs=pl.BlockSpec((tile_rows, cols), lambda i: (i, 0)),
            ),
            compiler_params=pltpu.CompilerParams(
                dimension_semantics=("parallel",),
            ),
            # Identity needs zero net data movement: alias output onto input
            # so XLA does not allocate + fill a second HBM buffer.
            input_output_aliases={0: 0},
        )(x2d)
        return y2d.reshape(orig_shape)

    # Fallback (total not a multiple of 128): single full-array block, still
    # zero padding — full-extent last-two dims bypass the (8,128) constraint.
    x2d = x.reshape(1, total)
    y2d = pl.pallas_call(
        _identity_kernel,
        out_shape=jax.ShapeDtypeStruct((1, total), x.dtype),
        grid=(1,),
        in_specs=[pl.BlockSpec((1, total), lambda i: (0, 0))],
        out_specs=pl.BlockSpec((1, total), lambda i: (0, 0)),
        input_output_aliases={0: 0},
    )(x2d)
    return y2d.reshape(orig_shape)


if __name__ == "__main__":
    key = jax.random.PRNGKey(0)
    # NCHW input consistent with a conv-style backbone: batch=2, ch=4, 16x16.
    x = jax.random.normal(key, (2, 4, 16, 16), dtype=jnp.float32)

    y = identity(x)
    jax.block_until_ready(y)

    assert y.shape == x.shape
    assert y.dtype == x.dtype
    assert bool(jnp.all(y == x))
    print("KERNEL_OK")
</pallas_src>

<mosaic_0001>
module attributes {stable_mosaic.version = 11 : i64} {
  func.func @_identity_kernel(%arg0: i32, %arg1: memref<1x2048xf32, #tpu.memory_space<vmem>>, %arg2: memref<1x2048xf32, #tpu.memory_space<vmem>>) attributes {dimension_semantics = [#tpu.dimension_semantics<parallel>], iteration_bounds = array<i64: 1>, scalar_prefetch = 0 : i64, scratch_operands = 0 : i64, tpu.core_type = #tpu.core_type<tc>, window_params = [{transform_indices = @transform_0, window_bounds = array<i64: 1, 2048>}, {transform_indices = @transform_1, window_bounds = array<i64: 1, 2048>}]} {
    %c0 = arith.constant 0 : index
    %c0_0 = arith.constant 0 : index
    %0 = vector.load %arg1[%c0, %c0_0] : memref<1x2048xf32, #tpu.memory_space<vmem>>, vector<1x2048xf32>
    %c0_1 = arith.constant 0 : index
    %c0_2 = arith.constant 0 : index
    %1 = vector.load %arg2[%c0_1, %c0_2] : memref<1x2048xf32, #tpu.memory_space<vmem>>, vector<1x2048xf32>
    tpu.vector_store %arg2[%c0_1, %c0_2], %0 {strides = array<i32>} : memref<1x2048xf32, #tpu.memory_space<vmem>>, vector<1x2048xf32>,
    return
  }
  func.func @transform_0(%arg0: i32) -> (i32, i32) {
    %c0_i32 = arith.constant 0 : i32
    %c0_i32_0 = arith.constant 0 : i32
    return %arg0, %c0_i32 : i32, i32
  }
  func.func @transform_1(%arg0: i32) -> (i32, i32) {
    %c0_i32 = arith.constant 0 : i32
    %c0_i32_0 = arith.constant 0 : i32
    return %arg0, %c0_i32 : i32, i32
  }
}

</mosaic_0001>

<llo_original>
// kernel: identity.1
$region0: #{identity.1}
  #allocation0 [shape = 'u32[]', space=smem, size = 0x4, offset = 0x4, fixed_abs, tag = 'smem constant byte address 0x4 - core index']
  #allocation1 [shape = 'u32[144,128]{1,0:T(1,128)}', space=vmem, size = 0x12000, scoped, tag = 'internal scratch']
  %s0 = inlined_call_operand.vmem [shape: f32[1,2048], index: 0, kind: input, shape index: {}, may-alias: {0,1}]
  %s1 = inlined_call_operand.vmem [shape: f32[1,2048], index: 1, kind: output, shape index: {}, may-alias: {0,1}]
  %s2 = sld [smem:[#allocation0]]
  $region14: #{identity.1} parent=0
    _
  %s4 = ssub.s32 1, %s2
  %s5 = scalar_select 0, %s4, %s2
  // Predicated region
  $region2: #{identity.1} parent=0 // pred_check
    _
  $region3: #{identity.1} parent=0 // pred_check_branch
    %7 = sbr.rel (0) target = $region5
  $region4: #{identity.1} parent=0 // pred_region
    _
  $region5: #{identity.1} parent=0 // pred_fallthru
    _
  %v8 = vld [vmem:[%s0] sm:$0xff]
  %v9 = vld [vmem:[%s0 + $0x8] sm:$0xff]
  %10 = vst [vmem:[%s1] sm:$0xff] %v8
  %11 = vst [vmem:[%s1 + $0x8] sm:$0xff] %v9
  // Predicated region
  $region6: #{identity.1} parent=0 // pred_check
    _
  $region7: #{identity.1} parent=0 // pred_check_branch
    %13 = sbr.rel (0) target = $region9
  $region8: #{identity.1} parent=0 // pred_region
    _
  $region9: #{identity.1} parent=0 // pred_fallthru
    _
  // Predicated region
  $region10: #{identity.1} parent=0 // pred_check
    _
  $region11: #{identity.1} parent=0 // pred_check_branch
    %15 = sbr.rel (0) target = $region13
  $region12: #{identity.1} parent=0 // pred_region
    _
  $region13: #{identity.1} parent=0 // pred_fallthru
    _

</llo_original>
